<compile_context>
chip_gen: v5e
topology: v5e:2x2
jax: 0.10.0
libtpu: 0.0.40
codegen_flags: <defaults>
</compile_context>

<pallas_src>
import functools

import jax
import jax.numpy as jnp
from jax.experimental import pallas as pl
from jax.experimental.pallas import tpu as pltpu


def _fused_forward_kernel(pt_ref, cw_ref, cb_ref, wt_ref, sel_ref, fcb_ref, o_ref, *,
                          n_way, bs_pad):
    """Fused: conv(im2col matmul) + bias + ReLU -> 2x2 maxpool -> flatten -> fc + bias."""
    # ---- conv as one transposed (lane-dense) matmul: [Cout, 9C] @ [9C, 4*BS_pad]  (f32)
    conv = jnp.dot(cw_ref[...], pt_ref[...], preferred_element_type=jnp.float32)
    conv = jnp.maximum(conv + cb_ref[...], 0.0)                     # bias + ReLU

    # ---- 2x2 maxpool: four pool offsets live in four 128-aligned lane blocks of width BS_pad.
    pooled = jnp.maximum(
        jnp.maximum(conv[:, 0:bs_pad], conv[:, bs_pad:2 * bs_pad]),
        jnp.maximum(conv[:, 2 * bs_pad:3 * bs_pad], conv[:, 3 * bs_pad:4 * bs_pad]))
    # pooled[c, b*S + s] == maxpooled feature map, NCHW flatten order per batch.  [Cout, BS_pad]

    # ---- fc head, stage 1 (VPU + sublane reduce): contract the channel axis per class.
    #      g[n, j] = sum_c wt[n, c, j] * pooled[c, j]        (wt pre-tiled over batch)
    g = jnp.concatenate(
        [jnp.sum(wt_ref[n] * pooled, axis=0, keepdims=True) for n in range(n_way)],
        axis=0)                                                     # [n_way, BS_pad]

    # ---- fc head, stage 2 (single MXU dot): contract the pixel (lane) axis with the batch
    #      selector.  sel[b, j] = 1 iff lane j belongs to batch b (0 on padding lanes).
    logits = jax.lax.dot_general(sel_ref[...], g, (((1,), (1,)), ((), ())),
                                 preferred_element_type=jnp.float32)   # [B, n_way]

    o_ref[...] = (logits + fcb_ref[...]).astype(o_ref.dtype)


def finetune_linear_forward(x_nchw, conv_w, conv_b, fc_w, fc_b):
    """x_nchw: [B, C, H, W] f32.  conv_w: [Cout, C, 3, 3], conv_b: [Cout].
    fc_w: [Cout*(H//2)*(W//2), n_way] (NCHW flatten order), fc_b: [n_way]."""
    B, C, H, W = x_nchw.shape
    Cout = conv_w.shape[0]
    n_way = fc_w.shape[1]
    Hh, Wh = H // 2, W // 2
    S = Hh * Wh                                    # pooled pixels per image
    BS = B * S
    BS_pad = ((BS + 127) // 128) * 128             # keep pool lane-blocks 128-aligned

    # ---- tiny one-shot XLA layout glue (same jit; ~40 KiB total):
    # patchesT[(dy*3+dx)*C + cin, (py*2+px)*BS_pad + b*S + h'*Wh + w']
    #   = xpad[b, cin, 2h'+py+dy, 2w'+px+dx]
    xpad = jnp.pad(x_nchw, ((0, 0), (0, 0), (1, 1), (1, 1)))
    wins = jnp.stack(
        [jnp.stack([xpad[:, :, dy:dy + H, dx:dx + W] for dx in range(3)], 0)
         for dy in range(3)], 0)                               # [3,3,B,C,H,W]
    wins = wins.reshape(3, 3, B, C, Hh, 2, Wh, 2)              # [dy,dx,b,cin,h',py,w',px]
    patchesT = jnp.transpose(wins, (0, 1, 3, 5, 7, 2, 4, 6)).reshape(9 * C, 4, BS)
    if BS_pad != BS:
        patchesT = jnp.pad(patchesT, ((0, 0), (0, 0), (0, BS_pad - BS)))
    patchesT = patchesT.reshape(9 * C, 4 * BS_pad).astype(jnp.float32)

    cwT = jnp.transpose(conv_w, (0, 2, 3, 1)).reshape(Cout, 9 * C).astype(jnp.float32)
    cb2 = conv_b.reshape(Cout, 1).astype(jnp.float32)

    # fc weight, lane-dense and pre-tiled over batch: wt[n, c, b*S + s] = fc_w[c*S + s, n]
    w3 = jnp.transpose(fc_w.reshape(Cout, S, n_way), (2, 0, 1))     # [n_way, Cout, S]
    reps = (BS_pad + S - 1) // S
    wt = jnp.tile(w3, (1, 1, reps))[:, :, :BS_pad].astype(jnp.float32)   # [n_way, Cout, BS_pad]

    # batch selector: sel[b, j] = 1 iff lane j is in batch b's block (zero on padding lanes)
    sel = (jnp.arange(BS_pad)[None, :] // S == jnp.arange(B)[:, None]).astype(jnp.float32)

    fcb2 = fc_b.reshape(1, n_way).astype(jnp.float32)

    kernel = functools.partial(_fused_forward_kernel, n_way=n_way, bs_pad=BS_pad)
    return pl.pallas_call(
        kernel,
        out_shape=jax.ShapeDtypeStruct((B, n_way), jnp.float32),
        in_specs=[
            pl.BlockSpec(memory_space=pltpu.MemorySpace.VMEM),   # patchesT [9C, 4*BS_pad]
            pl.BlockSpec(memory_space=pltpu.MemorySpace.VMEM),   # conv w^T [Cout, 9C]
            pl.BlockSpec(memory_space=pltpu.MemorySpace.VMEM),   # conv bias [Cout, 1]
            pl.BlockSpec(memory_space=pltpu.MemorySpace.VMEM),   # fc weight [n_way, Cout, BS_pad]
            pl.BlockSpec(memory_space=pltpu.MemorySpace.VMEM),   # batch selector [B, BS_pad]
            pl.BlockSpec(memory_space=pltpu.MemorySpace.VMEM),   # fc bias [1, n_way]
        ],
        out_specs=pl.BlockSpec(memory_space=pltpu.MemorySpace.VMEM),
    )(patchesT, cwT, cb2, wt, sel, fcb2)


class FinetuneLinearPallas:
    """Stand-in backbone (conv3x3+ReLU+maxpool2x2+flatten) + nn.Linear head, fused in Pallas."""

    def __init__(self, key, in_ch=4, hid=8, n_way=5, img=16):
        k1, k2, k3 = jax.random.split(key, 3)
        self.conv_w = 0.1 * jax.random.normal(k1, (hid, in_ch, 3, 3), jnp.float32)
        self.conv_b = jnp.zeros((hid,), jnp.float32)
        feat_dim = hid * (img // 2) * (img // 2)               # final_feat_dim
        self.fc_w = 0.05 * jax.random.normal(k2, (feat_dim, n_way), jnp.float32)
        self.fc_b = 0.01 * jax.random.normal(k3, (n_way,), jnp.float32)

    def __call__(self, x_nchw):
        return finetune_linear_forward(x_nchw, self.conv_w, self.conv_b,
                                       self.fc_w, self.fc_b)


def _reference_forward(x, conv_w, conv_b, fc_w, fc_b):
    """Pure-JAX reference of the stand-in backbone + linear head."""
    y = jax.lax.conv_general_dilated(x, conv_w, (1, 1), "SAME",
                                     dimension_numbers=("NCHW", "OIHW", "NCHW"))
    y = jnp.maximum(y + conv_b[None, :, None, None], 0.0)
    B, Cout, H, W = y.shape
    y = y.reshape(B, Cout, H // 2, 2, W // 2, 2).max(axis=(3, 5))
    feat = y.reshape(B, -1)                                    # NCHW flatten: (c, h', w')
    return feat @ fc_w + fc_b[None, :]


if __name__ == "__main__":
    key = jax.random.PRNGKey(0)
    k_param, k_input = jax.random.split(key)

    model = FinetuneLinearPallas(k_param, in_ch=4, hid=8, n_way=5, img=16)
    x = jax.random.normal(k_input, (2, 4, 16, 16), jnp.float32)   # NCHW, like PyTorch

    forward = jax.jit(model.__call__)
    out = jax.block_until_ready(forward(x))

    ref = _reference_forward(x, model.conv_w, model.conv_b, model.fc_w, model.fc_b)

    assert out.shape == (2, 5), out.shape
    assert bool(jnp.all(jnp.isfinite(out))), "non-finite logits"
    assert bool(jnp.allclose(out, ref, rtol=5e-2, atol=5e-2)), (out, ref)
    print("KERNEL_OK")
</pallas_src>

<mosaic_0001>
module attributes {stable_mosaic.version = 11 : i64} {
  func.func @_fused_forward_kernel(%arg0: memref<36x512xf32, #tpu.memory_space<vmem>>, %arg1: memref<8x36xf32, #tpu.memory_space<vmem>>, %arg2: memref<8x1xf32, #tpu.memory_space<vmem>>, %arg3: memref<5x8x128xf32, #tpu.memory_space<vmem>>, %arg4: memref<2x128xf32, #tpu.memory_space<vmem>>, %arg5: memref<1x5xf32, #tpu.memory_space<vmem>>, %arg6: memref<2x5xf32, #tpu.memory_space<vmem>>) attributes {dimension_semantics = [], scalar_prefetch = 0 : i64, scratch_operands = 0 : i64, tpu.core_type = #tpu.core_type<tc>} {
    %c0 = arith.constant 0 : index
    %c0_0 = arith.constant 0 : index
    %0 = vector.load %arg1[%c0, %c0_0] : memref<8x36xf32, #tpu.memory_space<vmem>>, vector<8x36xf32>
    %c0_1 = arith.constant 0 : index
    %c0_2 = arith.constant 0 : index
    %1 = vector.load %arg0[%c0_1, %c0_2] : memref<36x512xf32, #tpu.memory_space<vmem>>, vector<36x512xf32>
    %cst = arith.constant dense<0.000000e+00> : vector<8x512xf32>
    %2 = tpu.matmul %0, %1, %cst {dimension_numbers = #tpu.dot_dimension_numbers<[1], [0], [0], [1], [0, 0, 1, 1], [], []>} : vector<8x36xf32>, vector<36x512xf32>, vector<8x512xf32> -> vector<8x512xf32>
    %c0_3 = arith.constant 0 : index
    %c0_4 = arith.constant 0 : index
    %3 = vector.load %arg2[%c0_3, %c0_4] : memref<8x1xf32, #tpu.memory_space<vmem>>, vector<8x1xf32>
    %4 = vector.broadcast %3 : vector<8x1xf32> to vector<8x512xf32>
    %5 = arith.addf %2, %4 : vector<8x512xf32>
    %cst_5 = arith.constant 0.000000e+00 : f32
    %6 = vector.broadcast %cst_5 : f32 to vector<8x512xf32>
    %7 = arith.maximumf %5, %6 : vector<8x512xf32>
    %8 = vector.extract_strided_slice %7 {offsets = [0, 0], sizes = [8, 128], strides = [1, 1]} : vector<8x512xf32> to vector<8x128xf32>
    %9 = vector.extract_strided_slice %7 {offsets = [0, 128], sizes = [8, 128], strides = [1, 1]} : vector<8x512xf32> to vector<8x128xf32>
    %10 = arith.maximumf %8, %9 : vector<8x128xf32>
    %11 = vector.extract_strided_slice %7 {offsets = [0, 256], sizes = [8, 128], strides = [1, 1]} : vector<8x512xf32> to vector<8x128xf32>
    %12 = vector.extract_strided_slice %7 {offsets = [0, 384], sizes = [8, 128], strides = [1, 1]} : vector<8x512xf32> to vector<8x128xf32>
    %13 = arith.maximumf %11, %12 : vector<8x128xf32>
    %14 = arith.maximumf %10, %13 : vector<8x128xf32>
    %c0_6 = arith.constant 0 : index
    %c0_7 = arith.constant 0 : index
    %c0_8 = arith.constant 0 : index
    %15 = vector.load %arg3[%c0_6, %c0_7, %c0_8] : memref<5x8x128xf32, #tpu.memory_space<vmem>>, vector<1x8x128xf32>
    %16 = vector.shape_cast %15 : vector<1x8x128xf32> to vector<8x128xf32>
    %17 = arith.mulf %16, %14 : vector<8x128xf32>
    %cst_9 = arith.constant dense<0.000000e+00> : vector<128xf32>
    %18 = vector.multi_reduction <add>, %17, %cst_9 [0] : vector<8x128xf32> to vector<128xf32>
    %19 = vector.shape_cast %18 : vector<128xf32> to vector<1x128xf32>
    %c1 = arith.constant 1 : index
    %c0_10 = arith.constant 0 : index
    %c0_11 = arith.constant 0 : index
    %20 = vector.load %arg3[%c1, %c0_10, %c0_11] : memref<5x8x128xf32, #tpu.memory_space<vmem>>, vector<1x8x128xf32>
    %21 = vector.shape_cast %20 : vector<1x8x128xf32> to vector<8x128xf32>
    %22 = arith.mulf %21, %14 : vector<8x128xf32>
    %cst_12 = arith.constant dense<0.000000e+00> : vector<128xf32>
    %23 = vector.multi_reduction <add>, %22, %cst_12 [0] : vector<8x128xf32> to vector<128xf32>
    %24 = vector.shape_cast %23 : vector<128xf32> to vector<1x128xf32>
    %c2 = arith.constant 2 : index
    %c0_13 = arith.constant 0 : index
    %c0_14 = arith.constant 0 : index
    %25 = vector.load %arg3[%c2, %c0_13, %c0_14] : memref<5x8x128xf32, #tpu.memory_space<vmem>>, vector<1x8x128xf32>
    %26 = vector.shape_cast %25 : vector<1x8x128xf32> to vector<8x128xf32>
    %27 = arith.mulf %26, %14 : vector<8x128xf32>
    %cst_15 = arith.constant dense<0.000000e+00> : vector<128xf32>
    %28 = vector.multi_reduction <add>, %27, %cst_15 [0] : vector<8x128xf32> to vector<128xf32>
    %29 = vector.shape_cast %28 : vector<128xf32> to vector<1x128xf32>
    %c3 = arith.constant 3 : index
    %c0_16 = arith.constant 0 : index
    %c0_17 = arith.constant 0 : index
    %30 = vector.load %arg3[%c3, %c0_16, %c0_17] : memref<5x8x128xf32, #tpu.memory_space<vmem>>, vector<1x8x128xf32>
    %31 = vector.shape_cast %30 : vector<1x8x128xf32> to vector<8x128xf32>
    %32 = arith.mulf %31, %14 : vector<8x128xf32>
    %cst_18 = arith.constant dense<0.000000e+00> : vector<128xf32>
    %33 = vector.multi_reduction <add>, %32, %cst_18 [0] : vector<8x128xf32> to vector<128xf32>
    %34 = vector.shape_cast %33 : vector<128xf32> to vector<1x128xf32>
    %c4 = arith.constant 4 : index
    %c0_19 = arith.constant 0 : index
    %c0_20 = arith.constant 0 : index
    %35 = vector.load %arg3[%c4, %c0_19, %c0_20] : memref<5x8x128xf32, #tpu.memory_space<vmem>>, vector<1x8x128xf32>
    %36 = vector.shape_cast %35 : vector<1x8x128xf32> to vector<8x128xf32>
    %37 = arith.mulf %36, %14 : vector<8x128xf32>
    %cst_21 = arith.constant dense<0.000000e+00> : vector<128xf32>
    %38 = vector.multi_reduction <add>, %37, %cst_21 [0] : vector<8x128xf32> to vector<128xf32>
    %39 = vector.shape_cast %38 : vector<128xf32> to vector<1x128xf32>
    %40 = tpu.concatenate %19, %24, %29, %34, %39 in 0 : vector<1x128xf32>, vector<1x128xf32>, vector<1x128xf32>, vector<1x128xf32>, vector<1x128xf32> -> vector<5x128xf32>
    %c0_22 = arith.constant 0 : index
    %c0_23 = arith.constant 0 : index
    %41 = vector.load %arg4[%c0_22, %c0_23] : memref<2x128xf32, #tpu.memory_space<vmem>>, vector<2x128xf32>
    %cst_24 = arith.constant dense<0.000000e+00> : vector<2x5xf32>
    %42 = tpu.matmul %41, %40, %cst_24 {dimension_numbers = #tpu.dot_dimension_numbers<[1], [1], [0], [0], [0, 0, 1, 0], [], []>} : vector<2x128xf32>, vector<5x128xf32>, vector<2x5xf32> -> vector<2x5xf32>
    %c0_25 = arith.constant 0 : index
    %c0_26 = arith.constant 0 : index
    %43 = vector.load %arg5[%c0_25, %c0_26] : memref<1x5xf32, #tpu.memory_space<vmem>>, vector<1x5xf32>
    %44 = vector.broadcast %43 : vector<1x5xf32> to vector<2x5xf32>
    %45 = arith.addf %42, %44 : vector<2x5xf32>
    %c0_27 = arith.constant 0 : index
    %c0_28 = arith.constant 0 : index
    %46 = vector.load %arg6[%c0_27, %c0_28] : memref<2x5xf32, #tpu.memory_space<vmem>>, vector<2x5xf32>
    tpu.vector_store %arg6[%c0_27, %c0_28], %45 {strides = array<i32>} : memref<2x5xf32, #tpu.memory_space<vmem>>, vector<2x5xf32>,
    return
  }
}

</mosaic_0001>

<llo_original>
// kernel: tile.7
$region0: #{tile.7}
  %s0 = inlined_call_operand.vmem [shape: f32[5,8,2,64], index: 0, kind: input, shape index: {}]
  %s1 = inlined_call_operand.vmem [shape: f32[5,8,128], index: 1, kind: output, shape index: {}]
  $region1: #{tile.7} parent=0
    #allocation0 [shape = 'u8[163840]{0}', space=vmem, size = 0x28000, scoped, tag = 'scoped mem for input reshape']
    %s3 = ssub.s32 4, 1
    %s4 = scalar_lea.vmem %s0, 78
    %v5 = vld [vmem:[%s4] sm:%s3]
    %s6 = scalar_lea.vmem [#allocation0], 312
    %7 = vst [vmem:[%s6] sm:%s3] %v5
    %s8 = scalar_lea.vmem %s0, 76
    %v9 = vld [vmem:[%s8] sm:%s3]
    %s10 = scalar_lea.vmem [#allocation0], 304
    %11 = vst [vmem:[%s10] sm:%s3] %v9
    %s12 = scalar_lea.vmem %s0, 74
    %v13 = vld [vmem:[%s12] sm:%s3]
    %s14 = scalar_lea.vmem [#allocation0], 296
    %15 = vst [vmem:[%s14] sm:%s3] %v13
    %s16 = scalar_lea.vmem %s0, 72
    %v17 = vld [vmem:[%s16] sm:%s3]
    %s18 = scalar_lea.vmem [#allocation0], 288
    %19 = vst [vmem:[%s18] sm:%s3] %v17
    %s20 = scalar_lea.vmem %s0, 70
    %v21 = vld [vmem:[%s20] sm:%s3]
    %s22 = scalar_lea.vmem [#allocation0], 280
    %23 = vst [vmem:[%s22] sm:%s3] %v21
    %s24 = scalar_lea.vmem %s0, 68
    %v25 = vld [vmem:[%s24] sm:%s3]
    %s26 = scalar_lea.vmem [#allocation0], 272
    %27 = vst [vmem:[%s26] sm:%s3] %v25
    %s28 = scalar_lea.vmem %s0, 66
    %v29 = vld [vmem:[%s28] sm:%s3]
    %s30 = scalar_lea.vmem [#allocation0], 264
    %31 = vst [vmem:[%s30] sm:%s3] %v29
    %s32 = scalar_lea.vmem %s0, 64
    %v33 = vld [vmem:[%s32] sm:%s3]
    %s34 = scalar_lea.vmem [#allocation0], 256
    %35 = vst [vmem:[%s34] sm:%s3] %v33
    %s36 = scalar_lea.vmem %s0, 62
    %v37 = vld [vmem:[%s36] sm:%s3]
    %s38 = scalar_lea.vmem [#allocation0], 248
    %39 = vst [vmem:[%s38] sm:%s3] %v37
    %s40 = scalar_lea.vmem %s0, 60
    %v41 = vld [vmem:[%s40] sm:%s3]
    %s42 = scalar_lea.vmem [#allocation0], 240
    %43 = vst [vmem:[%s42] sm:%s3] %v41
    %s44 = scalar_lea.vmem %s0, 58
    %v45 = vld [vmem:[%s44] sm:%s3]
    %s46 = scalar_lea.vmem [#allocation0], 232
    %47 = vst [vmem:[%s46] sm:%s3] %v45
    %s48 = scalar_lea.vmem %s0, 56
    %v49 = vld [vmem:[%s48] sm:%s3]
    %s50 = scalar_lea.vmem [#allocation0], 224
    %51 = vst [vmem:[%s50] sm:%s3] %v49
    %s52 = scalar_lea.vmem %s0, 54
    %v53 = vld [vmem:[%s52] sm:%s3]
    %s54 = scalar_lea.vmem [#allocation0], 216
    %55 = vst [vmem:[%s54] sm:%s3] %v53
    %s56 = scalar_lea.vmem %s0, 52
    %v57 = vld [vmem:[%s56] sm:%s3]
    %s58 = scalar_lea.vmem [#allocation0], 208
    %59 = vst [vmem:[%s58] sm:%s3] %v57
    %s60 = scalar_lea.vmem %s0, 50
    %v61 = vld [vmem:[%s60] sm:%s3]
    %s62 = scalar_lea.vmem [#allocation0], 200
    %63 = vst [vmem:[%s62] sm:%s3] %v61
    %s64 = scalar_lea.vmem %s0, 48
    %v65 = vld [vmem:[%s64] sm:%s3]
    %s66 = scalar_lea.vmem [#allocation0], 192
    %67 = vst [vmem:[%s66] sm:%s3] %v65
    %s68 = scalar_lea.vmem %s0, 46
    %v69 = vld [vmem:[%s68] sm:%s3]
    %s70 = scalar_lea.vmem [#allocation0], 184
    %71 = vst [vmem:[%s70] sm:%s3] %v69
    %s72 = scalar_lea.vmem %s0, 44
    %v73 = vld [vmem:[%s72] sm:%s3]
    %s74 = scalar_lea.vmem [#allocation0], 176
    %75 = vst [vmem:[%s74] sm:%s3] %v73
    %s76 = scalar_lea.vmem %s0, 42
    %v77 = vld [vmem:[%s76] sm:%s3]
    %s78 = scalar_lea.vmem [#allocation0], 168
    %79 = vst [vmem:[%s78] sm:%s3] %v77
    %s80 = scalar_lea.vmem %s0, 40
    %v81 = vld [vmem:[%s80] sm:%s3]
    %s82 = scalar_lea.vmem [#allocation0], 160
    %83 = vst [vmem:[%s82] sm:%s3] %v81
    %s84 = scalar_lea.vmem %s0, 38
    %v85 = vld [vmem:[%s84] sm:%s3]
    %s86 = scalar_lea.vmem [#allocation0], 152
    %87 = vst [vmem:[%s86] sm:%s3] %v85
    %s88 = scalar_lea.vmem %s0, 36
    %v89 = vld [vmem:[%s88] sm:%s3]
    %s90 = scalar_lea.vmem [#allocation0], 144
    %91 = vst [vmem:[%s90] sm:%s3] %v89
    %s92 = scalar_lea.vmem %s0, 34
    %v93 = vld [vmem:[%s92] sm:%s3]
    %s94 = scalar_lea.vmem [#allocation0], 136
    %95 = vst [vmem:[%s94] sm:%s3] %v93
    %s96 = scalar_lea.vmem %s0, 32
    %v97 = vld [vmem:[%s96] sm:%s3]
    %s98 = scalar_lea.vmem [#allocation0], 128
    %99 = vst [vmem:[%s98] sm:%s3] %v97
    %s100 = scalar_lea.vmem %s0, 30
    %v101 = vld [vmem:[%s100] sm:%s3]
    %s102 = scalar_lea.vmem [#allocation0], 120
    %103 = vst [vmem:[%s102] sm:%s3] %v101
    %s104 = scalar_lea.vmem %s0, 28
    %v105 = vld [vmem:[%s104] sm:%s3]
    %s106 = scalar_lea.vmem [#allocation0], 112
    %107 = vst [vmem:[%s106] sm:%s3] %v105
    %s108 = scalar_lea.vmem %s0, 26
    %v109 = vld [vmem:[%s108] sm:%s3]
    %s110 = scalar_lea.vmem [#allocation0], 104
    %111 = vst [vmem:[%s110] sm:%s3] %v109
    %s112 = scalar_lea.vmem %s0, 24
    %v113 = vld [vmem:[%s112] sm:%s3]
    %s114 = scalar_lea.vmem [#allocation0], 96
    %115 = vst [vmem:[%s114] sm:%s3] %v113
    %s116 = scalar_lea.vmem %s0, 22
    %v117 = vld [vmem:[%s116] sm:%s3]
    %s118 = scalar_lea.vmem [#allocation0], 88
    %119 = vst [vmem:[%s118] sm:%s3] %v117
    %s120 = scalar_lea.vmem %s0, 20
    %v121 = vld [vmem:[%s120] sm:%s3]
    %s122 = scalar_lea.vmem [#allocation0], 80
    %123 = vst [vmem:[%s122] sm:%s3] %v121
    %s124 = scalar_lea.vmem %s0, 18
    %v125 = vld [vmem:[%s124] sm:%s3]
    %s126 = scalar_lea.vmem [#allocation0], 72
    %127 = vst [vmem:[%s126] sm:%s3] %v125
    %s128 = scalar_lea.vmem %s0, 16
    %v129 = vld [vmem:[%s128] sm:%s3]
    %s130 = scalar_lea.vmem [#allocation0], 64
    %131 = vst [vmem:[%s130] sm:%s3] %v129
    %s132 = scalar_lea.vmem %s0, 14
    %v133 = vld [vmem:[%s132] sm:%s3]
    %s134 = scalar_lea.vmem [#allocation0], 56
    %135 = vst [vmem:[%s134] sm:%s3] %v133
    %s136 = scalar_lea.vmem %s0, 12
    %v137 = vld [vmem:[%s136] sm:%s3]
    %s138 = scalar_lea.vmem [#allocation0], 48
    %139 = vst [vmem:[%s138] sm:%s3] %v137
    %s140 = scalar_lea.vmem %s0, 10
    %v141 = vld [vmem:[%s140] sm:%s3]
    %s142 = scalar_lea.vmem [#allocation0], 40
    %143 = vst [vmem:[%s142] sm:%s3] %v141
    %s144 = scalar_lea.vmem %s0, 8
    %v145 = vld [vmem:[%s144] sm:%s3]
    %s146 = scalar_lea.vmem [#allocation0], 32
    %147 = vst [vmem:[%s146] sm:%s3] %v145
    %s148 = scalar_lea.vmem %s0, 6
    %v149 = vld [vmem:[%s148] sm:%s3]
    %s150 = scalar_lea.vmem [#allocation0], 24
    %151 = vst [vmem:[%s150] sm:%s3] %v149
    %s152 = scalar_lea.vmem %s0, 4
    %v153 = vld [vmem:[%s152] sm:%s3]
    %s154 = scalar_lea.vmem [#allocation0], 16
    %155 = vst [vmem:[%s154] sm:%s3] %v153
    %s156 = scalar_lea.vmem %s0, 2
    %v157 = vld [vmem:[%s156] sm:%s3]
    %s158 = scalar_lea.vmem [#allocation0], 8
    %159 = vst [vmem:[%s158] sm:%s3] %v157
    %v160 = vld [vmem:[%s0] sm:%s3]
    %161 = vst [vmem:[#allocation0] sm:%s3] %v160
    %v162 = vld [vmem:[#allocation0] ss:$8 sm:$0xf]
    %v163 = vld [vmem:[#allocation0] ss:$8 sm:$0xf0]
    %vm164 = vcmask 1047556
    %v165 = vsel %vm164, %v163, %v162
    %vm166 = vcmask 523264
    %167 = vst.msk [vmem:[%s1] sm:$0xff] %vm166, %v165
    %s168 = scalar_lea.vmem [#allocation0], 64
    %v169 = vld [vmem:[%s168] ss:$8 sm:$0xf]
    %s170 = scalar_lea.vmem [#allocation0], 64
    %v171 = vld [vmem:[%s170] ss:$8 sm:$0xf0]
    %vm172 = vcmask 1047556
    %v173 = vsel %vm172, %v171, %v169
    %vm174 = vcmask 523264
    %s175 = scalar_lea.vmem %s1, 8
    %176 = vst.msk [vmem:[%s175] sm:$0xff] %vm174, %v173
    %s177 = scalar_lea.vmem [#allocation0], 128
    %v178 = vld [vmem:[%s177] ss:$8 sm:$0xf]
    %s179 = scalar_lea.vmem [#allocation0], 128
    %v180 = vld [vmem:[%s179] ss:$8 sm:$0xf0]
    %vm181 = vcmask 1047556
    %v182 = vsel %vm181, %v180, %v178
    %vm183 = vcmask 523264
    %s184 = scalar_lea.vmem %s1, 16
    %185 = vst.msk [vmem:[%s184] sm:$0xff] %vm183, %v182
    %s186 = scalar_lea.vmem [#allocation0], 192
    %v187 = vld [vmem:[%s186] ss:$8 sm:$0xf]
    %s188 = scalar_lea.vmem [#allocation0], 192
    %v189 = vld [vmem:[%s188] ss:$8 sm:$0xf0]
    %vm190 = vcmask 1047556
    %v191 = vsel %vm190, %v189, %v187
    %vm192 = vcmask 523264
    %s193 = scalar_lea.vmem %s1, 24
    %194 = vst.msk [vmem:[%s193] sm:$0xff] %vm192, %v191
    %s195 = scalar_lea.vmem [#allocation0], 256
    %v196 = vld [vmem:[%s195] ss:$8 sm:$0xf]
    %s197 = scalar_lea.vmem [#allocation0], 256
    %v198 = vld [vmem:[%s197] ss:$8 sm:$0xf0]
    %vm199 = vcmask 1047556
    %v200 = vsel %vm199, %v198, %v196
    %vm201 = vcmask 523264
    %s202 = scalar_lea.vmem %s1, 32
    %203 = vst.msk [vmem:[%s202] sm:$0xff] %vm201, %v200
    %s204 = scalar_lea.vmem [#allocation0], 1
    %v205 = vld [vmem:[%s204] ss:$8 sm:$0xf]
    %s206 = scalar_lea.vmem [#allocation0], 1
    %v207 = vld [vmem:[%s206] ss:$8 sm:$0xf0]
    %vm208 = vcmask 1047556
    %v209 = vsel %vm208, %v207, %v205
    %210 = vrot.lane.b32.xlu0 %v209, 64
    %v211 = vpop.permute.xlu0 %210
    %vm212 = vcmask 1048064
    %213 = vst.msk [vmem:[%s1] sm:$0xff] %vm212, %v211
    %s214 = scalar_lea.vmem [#allocation0], 257
    %v215 = vld [vmem:[%s214] ss:$8 sm:$0xf]
    %s216 = scalar_lea.vmem [#allocation0], 257
    %v217 = vld [vmem:[%s216] ss:$8 sm:$0xf0]
    %vm218 = vcmask 1047556
    %v219 = vsel %vm218, %v217, %v215
    %220 = vrot.lane.b32.xlu0 %v219, 64
    %v221 = vpop.permute.xlu0 %220
    %vm222 = vcmask 1048064
    %s223 = scalar_lea.vmem %s1, 32
    %224 = vst.msk [vmem:[%s223] sm:$0xff] %vm222, %v221
    %s225 = scalar_lea.vmem [#allocation0], 65
    %v226 = vld [vmem:[%s225] ss:$8 sm:$0xf]
    %s227 = scalar_lea.vmem [#allocation0], 65
    %v228 = vld [vmem:[%s227] ss:$8 sm:$0xf0]
    %vm229 = vcmask 1047556
    %v230 = vsel %vm229, %v228, %v226
    %231 = vrot.lane.b32.xlu0 %v230, 64
    %v232 = vpop.permute.xlu0 %231
    %vm233 = vcmask 1048064
    %s234 = scalar_lea.vmem %s1, 8
    %235 = vst.msk [vmem:[%s234] sm:$0xff] %vm233, %v232
    %s236 = scalar_lea.vmem [#allocation0], 129
    %v237 = vld [vmem:[%s236] ss:$8 sm:$0xf]
    %s238 = scalar_lea.vmem [#allocation0], 129
    %v239 = vld [vmem:[%s238] ss:$8 sm:$0xf0]
    %vm240 = vcmask 1047556
    %v241 = vsel %vm240, %v239, %v237
    %242 = vrot.lane.b32.xlu0 %v241, 64
    %v243 = vpop.permute.xlu0 %242
    %vm244 = vcmask 1048064
    %s245 = scalar_lea.vmem %s1, 16
    %246 = vst.msk [vmem:[%s245] sm:$0xff] %vm244, %v243
    %s247 = scalar_lea.vmem [#allocation0], 193
    %v248 = vld [vmem:[%s247] ss:$8 sm:$0xf]
    %s249 = scalar_lea.vmem [#allocation0], 193
    %v250 = vld [vmem:[%s249] ss:$8 sm:$0xf0]
    %vm251 = vcmask 1047556
    %v252 = vsel %vm251, %v250, %v248
    %253 = vrot.lane.b32.xlu0 %v252, 64
    %v254 = vpop.permute.xlu0 %253
    %vm255 = vcmask 1048064
    %s256 = scalar_lea.vmem %s1, 24
    %257 = vst.msk [vmem:[%s256] sm:$0xff] %vm255, %v254

// kernel: a_call__.1
$region0: #{a_call__.1}
  #allocation0 [shape = 'u32[]', space=smem, size = 0x4, offset = 0x4, fixed_abs, tag = 'smem constant byte address 0x4 - core index']
  #allocation1 [shape = 'u32[72,128]{1,0:T(1,128)}', space=vmem, size = 0x9000, scoped, tag = 'internal scratch']
  %s0 = inlined_call_operand.vmem [shape: f32[36,512], index: 0, kind: input, shape index: {}]
  %s1 = inlined_call_operand.vmem [shape: f32[8,36], index: 1, kind: input, shape index: {}]
  %s2 = inlined_call_operand.vmem [shape: f32[8,1], index: 2, kind: input, shape index: {}]
  %s3 = inlined_call_operand.vmem [shape: f32[5,8,128], index: 3, kind: input, shape index: {}]
  %s4 = inlined_call_operand.vmem [shape: f32[2,128], index: 4, kind: input, shape index: {}]
  %s5 = inlined_call_operand.vmem [shape: f32[1,5], index: 5, kind: input, shape index: {}]
  %s6 = inlined_call_operand.hbm [shape: f32[2,5], index: 6, kind: output, shape index: {}]
  %s7 = sld [smem:[#allocation0]]
  $region34: #{a_call__.1} parent=0
    _
  %s9 = ssub.s32 1, %s7
  %s10 = scalar_select 0, %s9, %s7
  $region1: #{a_call__.1} parent=0
    #allocation2 [shape = 'u8[1024]{0}', space=vmem, size = 0x400, scoped, tag = 'output window, operand 0, single buffered']
    #allocation3 [shape = 's32[1]{0}', space=sflag, size = 0x4, scoped, tag = 'scoped memory for a_call__.1']
    %11 = vsyncpa [#allocation3], 0
    // Predicated region
    $region2: #{a_call__.1} parent=1 // pred_check
      _
    $region3: #{a_call__.1} parent=1 // pred_check_branch
      %13 = sbr.rel (0) target = $region5
    $region4: #{a_call__.1} parent=1 // pred_region
      _
    $region5: #{a_call__.1} parent=1 // pred_fallthru
      _
    // Predicated region
    $region6: #{a_call__.1} parent=1 // pred_check
      _
    $region7: #{a_call__.1} parent=1 // pred_check_branch
      %15 = sbr.rel (0) target = $region9
    $region8: #{a_call__.1} parent=1 // pred_region
      _
    $region9: #{a_call__.1} parent=1 // pred_fallthru
      _
    // Predicated region
    $region10: #{a_call__.1} parent=1 // pred_check
      _
    $region11: #{a_call__.1} parent=1 // pred_check_branch
      %17 = sbr.rel (0) target = $region13
    $region12: #{a_call__.1} parent=1 // pred_region
      _
    $region13: #{a_call__.1} parent=1 // pred_fallthru
      _
    // Predicated region
    $region14: #{a_call__.1} parent=1 // pred_check
      _
    $region15: #{a_call__.1} parent=1 // pred_check_branch
      %19 = sbr.rel (0) target = $region17
    $region16: #{a_call__.1} parent=1 // pred_region
      _
    $region17: #{a_call__.1} parent=1 // pred_fallthru
      _
    // Predicated region
    $region18: #{a_call__.1} parent=1 // pred_check
      _
    $region19: #{a_call__.1} parent=1 // pred_check_branch
      %21 = sbr.rel (0) target = $region21
    $region20: #{a_call__.1} parent=1 // pred_region
      _
    $region21: #{a_call__.1} parent=1 // pred_fallthru
      _
    // Predicated region
    $region22: #{a_call__.1} parent=1 // pred_check
      _
    $region23: #{a_call__.1} parent=1 // pred_check_branch
      %23 = sbr.rel (0) target = $region25
    $region24: #{a_call__.1} parent=1 // pred_region
      _
    $region25: #{a_call__.1} parent=1 // pred_fallthru
      _
    %v24 = vld [vmem:[%s1] sm:$0xff]
    %v25 = vld [vmem:[%s0] sm:$0xff]
    %v26 = vld [vmem:[%s0 + $0x8] sm:$0xff]
    %v27 = vld [vmem:[%s0 + $0x10] sm:$0xff]
    %v28 = vld [vmem:[%s0 + $0x18] sm:$0xff]
    %v29 = vld [vmem:[%s0 + $0x20] sm:$0xff]
    %v30 = vld [vmem:[%s0 + $0x28] sm:$0xff]
    %v31 = vld [vmem:[%s0 + $0x30] sm:$0xff]
    %v32 = vld [vmem:[%s0 + $0x38] sm:$0xff]
    %v33 = vld [vmem:[%s0 + $0x40] sm:$0xff]
    %v34 = vld [vmem:[%s0 + $0x48] sm:$0xff]
    %v35 = vld [vmem:[%s0 + $0x50] sm:$0xff]
    %v36 = vld [vmem:[%s0 + $0x58] sm:$0xff]
    %v37 = vld [vmem:[%s0 + $0x60] sm:$0xff]
    %v38 = vld [vmem:[%s0 + $0x68] sm:$0xff]
    %v39 = vld [vmem:[%s0 + $0x70] sm:$0xff]
    %v40 = vld [vmem:[%s0 + $0x78] sm:$0xff]
    %v41 = vld [vmem:[%s0 + $0x80] sm:$0xf]
    %v42 = vld [vmem:[%s0 + $0x88] sm:$0xf]
    %v43 = vld [vmem:[%s0 + $0x90] sm:$0xf]
    %v44 = vld [vmem:[%s0 + $0x98] sm:$0xf]
    %v45 = vld [vmem:[%s2] sm:$0xff]
    %47 = vset.pattern.permute.xlu0 0
    %48 = vperm.xlu0 %47, %v45
    %v49 = vpop.permute.xlu0 %48
    %vm51 = vcmask 293888
    %v53 = vsel %vm51, %v24, 0
    %vm55 = vcmask 1043456
    %v57 = vsel %vm55, %v41, 0
    %v60 = vsel %vm55, %v42, 0
    %v63 = vsel %vm55, %v43, 0
    %v66 = vsel %vm55, %v44, 0
    %68 = vmatpush.msra.mxu0 0.0
    %69 = vmatpush.msra.mxu0 0.0
    %70 = vmatpush.msra.mxu0 0.0
    %71 = vmatpush.msra.mxu0 0.0
    %72 = vmatpush.msra.mxu0 0.0
    %73 = vmatpush.msra.mxu0 0.0
    %74 = vmatpush.msra.mxu0 0.0
    %75 = vmatpush.msra.mxu0 0.0
    %76 = vmatpush.msra.mxu0 0.0
    %77 = vmatpush.msra.mxu0 0.0
    %78 = vmatpush.msra.mxu0 0.0
    %79 = vmatpush.msra.mxu0 %v57
    %80 = vmatpush.msra.mxu0 %v37
    %81 = vmatpush.msra.mxu0 %v33
    %82 = vmatpush.msra.mxu0 %v29
    %83 = vmatpush.msra.mxu0 %v25
    %84 = vmatmul.f32.gmra.mxu0 %v53
    %v85 = vpop.f32.mrf.mxu0
    %v86 = vadd.f32 %v49, %v85
    %87 = vdwg.mxu0
    %88 = vmatpush.msra.mxu0 0.0
    %89 = vmatpush.msra.mxu0 0.0
    %90 = vmatpush.msra.mxu0 0.0
    %91 = vmatpush.msra.mxu0 0.0
    %92 = vmatpush.msra.mxu0 0.0
    %93 = vmatpush.msra.mxu0 0.0
    %94 = vmatpush.msra.mxu0 0.0
    %95 = vmatpush.msra.mxu0 0.0
    %96 = vmatpush.msra.mxu0 0.0
    %97 = vmatpush.msra.mxu0 0.0
    %98 = vmatpush.msra.mxu0 0.0
    %99 = vmatpush.msra.mxu0 %v60
    %100 = vmatpush.msra.mxu0 %v38
    %101 = vmatpush.msra.mxu0 %v34
    %102 = vmatpush.msra.mxu0 %v30
    %103 = vmatpush.msra.mxu0 %v26
    %104 = vmatmul.f32.gmra.mxu0 %v53
    %v105 = vpop.f32.mrf.mxu0
    %v106 = vadd.f32 %v49, %v105
    %107 = vdwg.mxu0
    %108 = vmatpush.msra.mxu0 0.0
    %109 = vmatpush.msra.mxu0 0.0
    %110 = vmatpush.msra.mxu0 0.0
    %111 = vmatpush.msra.mxu0 0.0
    %112 = vmatpush.msra.mxu0 0.0
    %113 = vmatpush.msra.mxu0 0.0
    %114 = vmatpush.msra.mxu0 0.0
    %115 = vmatpush.msra.mxu0 0.0
    %116 = vmatpush.msra.mxu0 0.0
    %117 = vmatpush.msra.mxu0 0.0
    %118 = vmatpush.msra.mxu0 0.0
    %119 = vmatpush.msra.mxu0 %v63
    %120 = vmatpush.msra.mxu0 %v39
    %121 = vmatpush.msra.mxu0 %v35
    %122 = vmatpush.msra.mxu0 %v31
    %123 = vmatpush.msra.mxu0 %v27
    %124 = vmatmul.f32.gmra.mxu0 %v53
    %v125 = vpop.f32.mrf.mxu0
    %v126 = vadd.f32 %v49, %v125
    %127 = vdwg.mxu0
    %128 = vmatpush.msra.mxu0 0.0
    %129 = vmatpush.msra.mxu0 0.0
    %130 = vmatpush.msra.mxu0 0.0
    %131 = vmatpush.msra.mxu0 0.0
    %132 = vmatpush.msra.mxu0 0.0
    %133 = vmatpush.msra.mxu0 0.0
    %134 = vmatpush.msra.mxu0 0.0
    %135 = vmatpush.msra.mxu0 0.0
    %136 = vmatpush.msra.mxu0 0.0
    %137 = vmatpush.msra.mxu0 0.0
    %138 = vmatpush.msra.mxu0 0.0
    %139 = vmatpush.msra.mxu0 %v66
    %140 = vmatpush.msra.mxu0 %v40
    %141 = vmatpush.msra.mxu0 %v36
    %142 = vmatpush.msra.mxu0 %v32
    %143 = vmatpush.msra.mxu0 %v28
    %144 = vmatmul.f32.gmra.mxu0 %v53
    %v145 = vpop.f32.mrf.mxu0
    %v146 = vadd.f32 %v49, %v145
    %147 = vdwg.mxu0
    %v148 = vmax.f32 %v86, 0.0
    %v149 = vmax.f32 %v106, 0.0
    %v150 = vmax.f32 %v126, 0.0
    %v151 = vmax.f32 %v146, 0.0
    %v152 = vmax.f32 %v148, %v149
    %v153 = vmax.f32 %v150, %v151
    %v154 = vmax.f32 %v152, %v153
    %v155 = vld [vmem:[%s3] sm:$0xff]
    %v156 = vmul.f32 %v155, %v154
    %v157 = vrot.slane %v156, 4
    %v158 = vadd.f32 %v156, %v157
    %v159 = vrot.slane %v158, 2
    %v160 = vadd.f32 %v158, %v159
    %v161 = vrot.slane %v160, 1
    %v162 = vadd.f32 %v160, %v161
    %s163 = scalar_lea.vmem %s3, 8
    %v164 = vld [vmem:[%s163] sm:$0xff]
    %v165 = vmul.f32 %v164, %v154
    %v166 = vrot.slane %v165, 4
    %v167 = vadd.f32 %v165, %v166
    %v168 = vrot.slane %v167, 2
    %v169 = vadd.f32 %v167, %v168
    %v170 = vrot.slane %v169, 1
    %v171 = vadd.f32 %v169, %v170
    %s172 = scalar_lea.vmem %s3, 16
    %v173 = vld [vmem:[%s172] sm:$0xff]
    %v174 = vmul.f32 %v173, %v154
    %v175 = vrot.slane %v174, 4
    %v176 = vadd.f32 %v174, %v175
    %v177 = vrot.slane %v176, 2
    %v178 = vadd.f32 %v176, %v177
    %v179 = vrot.slane %v178, 1
    %v180 = vadd.f32 %v178, %v179
    %s181 = scalar_lea.vmem %s3, 24
    %v182 = vld [vmem:[%s181] sm:$0xff]
    %v183 = vmul.f32 %v182, %v154
    %v184 = vrot.slane %v183, 4
    %v185 = vadd.f32 %v183, %v184
    %v186 = vrot.slane %v185, 2
    %v187 = vadd.f32 %v185, %v186
    %v188 = vrot.slane %v187, 1
    %v189 = vadd.f32 %v187, %v188
    %s190 = scalar_lea.vmem %s3, 32
    %v191 = vld [vmem:[%s190] sm:$0xff]
    %v192 = vmul.f32 %v191, %v154
    %v193 = vrot.slane %v192, 4
    %v194 = vadd.f32 %v192, %v193
    %v195 = vrot.slane %v194, 2
    %v196 = vadd.f32 %v194, %v195
    %v197 = vrot.slane %v196, 1
    %v198 = vadd.f32 %v196, %v197
    %vm199 = vcmask 1040384
    %v200 = vsel %vm199, %v162, %v171
    %vm201 = vcmask 1041408
    %v202 = vsel %vm201, %v200, %v180
    %vm203 = vcmask 1042432
    %v204 = vsel %vm203, %v202, %v189
    %v205 = vsel %vm55, %v204, %v198
    %v206 = vld [vmem:[%s4] sm:$0x3]
    %v207 = vld [vmem:[%s5] sm:$0x1]
    %v209 = vperm.slane %v207, 0
    %211 = vmatpush.xpose.msra.mxu0 0.0
    %212 = vmatpush.xpose.msra.mxu0 0.0
    %213 = vmatpush.xpose.msra.mxu0 0.0
    %214 = vmatpush.xpose.msra.mxu0 0.0
    %215 = vmatpush.xpose.msra.mxu0 0.0
    %216 = vmatpush.xpose.msra.mxu0 0.0
    %217 = vmatpush.xpose.msra.mxu0 0.0
    %218 = vmatpush.xpose.msra.mxu0 0.0
    %219 = vmatpush.xpose.msra.mxu0 0.0
    %220 = vmatpush.xpose.msra.mxu0 0.0
    %221 = vmatpush.xpose.msra.mxu0 0.0
    %222 = vmatpush.xpose.msra.mxu0 0.0
    %223 = vmatpush.xpose.msra.mxu0 0.0
    %224 = vmatpush.xpose.msra.mxu0 0.0
    %225 = vmatpush.xpose.msra.mxu0 0.0
    %226 = vmatpush.xpose.msra.mxu0 %v205
    %227 = vmatmul.f32.gmra.mxu0 %v206
    %v228 = vpop.f32.mrf.mxu0
    %v229 = vadd.f32 %v209, %v228
    %230 = vdwg.mxu0
    %vm231 = vcmask 33792
    %232 = vst.msk [vmem:[#allocation2] sm:$0x3] %vm231, %v229
    // Predicated region
    $region26: #{a_call__.1} parent=1 // pred_check
      _
    $region27: #{a_call__.1} parent=1 // pred_check_branch
      %234 = sbr.rel (0) target = $region29
    $region28: #{a_call__.1} parent=1 // pred_region
      %236 = vsyncadd [#allocation3], 0
      %s238 = sshll.u32 [#allocation2], 4
      %s239 = int_to_ptr.vmem [resolvable:$true] %s238
      %s240 = sshll.u32 %s6, 4
      %s241 = int_to_ptr.hbm [resolvable:$true] %s240
      %243 = dma.vmem_to_hbm [thread:$0]  %s239, 32, %s241, [#allocation3]
    $region29: #{a_call__.1} parent=1 // pred_fallthru
      _
    // Predicated region
    $region30: #{a_call__.1} parent=1 // pred_check
      _
    $region31: #{a_call__.1} parent=1 // pred_check_branch
      %245 = sbr.rel (0) target = $region33
    $region32: #{a_call__.1} parent=1 // pred_region
      %247 = dma.done [#allocation3], 32
    $region33: #{a_call__.1} parent=1 // pred_fallthru
      _
    %248 = vsyncpa [#allocation3], 1

</llo_original>
